<compile_context>
chip_gen: v7x
topology: tpu7x:2x2x1
jax: 0.10.0
libtpu: 0.0.40
codegen_flags: <defaults>
</compile_context>

<pallas_src>
import functools
import math

import jax
import jax.numpy as jnp
from jax.experimental import pallas as pl
from jax.experimental.pallas import tpu as pltpu


# --------------------------------------------------------------------------------------
# Kernels
# --------------------------------------------------------------------------------------
def linear_unit_kernel(x_ref, w_ref, b_ref, g_ref, beta_ref, o_ref, acc_ref,
                       *, norm, eps, true_out_dim):
    """Tiled linear with fused epilogue.  grid = (m_tiles, k_tiles), K last."""
    k = pl.program_id(1)

    @pl.when(k == 0)
    def _():
        # Fold the bias into the accumulator init (saves one (TM, out) VPU add per tile).
        acc_ref[...] = jnp.broadcast_to(b_ref[...], acc_ref.shape)

    # bf16/f32 operands go straight to the MXU; accumulate in f32.
    acc_ref[...] += jnp.dot(x_ref[...], w_ref[...], preferred_element_type=jnp.float32)

    @pl.when(k == pl.num_programs(1) - 1)
    def _():
        y = acc_ref[...]
        if norm == "layer":
            # Fused single-pass stats (sum and sum-of-squares together); padded feature
            # columns are exactly zero, so dividing by the *true* out_dim is correct.
            inv_d = 1.0 / float(true_out_dim)
            s1 = jnp.sum(y, axis=-1, keepdims=True)
            s2 = jnp.sum(y * y, axis=-1, keepdims=True)
            mean = s1 * inv_d
            var = jnp.maximum(s2 * inv_d - mean * mean, 0.0)
            y = (y - mean) * jax.lax.rsqrt(var + eps)
            y = y * g_ref[...] + beta_ref[...]
            y = jnp.maximum(y, 0.0)
        elif norm == "none":
            y = jnp.maximum(y, 0.0)
        # norm == "batch": emit the raw linear output; stats + ReLU applied in pass 2.
        o_ref[...] = y.astype(o_ref.dtype)


def batchnorm_relu_kernel(y_ref, g_ref, beta_ref, o_ref, *, eps, true_n):
    """BatchNorm1d (training-mode batch stats, biased var) + ReLU over a feature tile."""
    y = y_ref[...].astype(jnp.float32)
    inv_n = 1.0 / float(true_n)
    s1 = jnp.sum(y, axis=0, keepdims=True)
    s2 = jnp.sum(y * y, axis=0, keepdims=True)
    mean = s1 * inv_n
    var = jnp.maximum(s2 * inv_n - mean * mean, 0.0)
    y = (y - mean) * jax.lax.rsqrt(var + eps)
    y = y * g_ref[...] + beta_ref[...]
    o_ref[...] = jnp.maximum(y, 0.0).astype(o_ref.dtype)


# --------------------------------------------------------------------------------------
# Wrapper
# --------------------------------------------------------------------------------------
def _round_up(v, m):
    return ((v + m - 1) // m) * m


def unit_forward(x, w, b, gamma, beta, *, norm="layer", eps=1e-5):
    """x: (N, in_dim); w: (in_dim, out_dim); b/gamma/beta: (1, out_dim)."""
    n, in_dim = x.shape
    assert w.shape[0] == in_dim
    out_dim = w.shape[1]

    # Tile sizes: lane-dense (multiples of 128) feature dims, sublane-aligned batch tiles.
    tk = min(512, _round_up(in_dim, 128))
    in_pad = _round_up(in_dim, tk)            # K tiles divide evenly -> no partial tiles
    out_pad = _round_up(out_dim, 128)
    tm = min(512, _round_up(n, 8))
    n_pad = _round_up(n, tm)

    # Zero-padded operands (zeros never change the matmul / layer-norm stats).
    xp = jnp.zeros((n_pad, in_pad), x.dtype).at[:n, :in_dim].set(x)
    wp = jnp.zeros((in_pad, out_pad), w.dtype).at[:in_dim, :out_dim].set(w)
    bp = jnp.zeros((1, out_pad), jnp.float32).at[:, :out_dim].set(b.astype(jnp.float32))
    gp = jnp.ones((1, out_pad), jnp.float32).at[:, :out_dim].set(gamma.astype(jnp.float32))
    betap = jnp.zeros((1, out_pad), jnp.float32).at[:, :out_dim].set(beta.astype(jnp.float32))

    grid = (n_pad // tm, in_pad // tk)
    lin_out_dtype = jnp.float32 if norm == "batch" else x.dtype

    kernel = functools.partial(linear_unit_kernel, norm=norm, eps=eps, true_out_dim=out_dim)
    y = pl.pallas_call(
        kernel,
        out_shape=jax.ShapeDtypeStruct((n_pad, out_pad), lin_out_dtype),
        grid_spec=pltpu.PrefetchScalarGridSpec(
            num_scalar_prefetch=0,
            grid=grid,
            in_specs=[
                pl.BlockSpec((tm, tk), lambda m, k: (m, k)),        # x tile
                pl.BlockSpec((tk, out_pad), lambda m, k: (k, 0)),    # weight K-slab
                pl.BlockSpec((1, out_pad), lambda m, k: (0, 0)),     # bias (resident)
                pl.BlockSpec((1, out_pad), lambda m, k: (0, 0)),     # gamma (resident)
                pl.BlockSpec((1, out_pad), lambda m, k: (0, 0)),     # beta (resident)
            ],
            out_specs=pl.BlockSpec((tm, out_pad), lambda m, k: (m, 0)),
            scratch_shapes=[pltpu.VMEM((tm, out_pad), jnp.float32)],
        ),
        compiler_params=pltpu.CompilerParams(
            dimension_semantics=("parallel", "arbitrary"),
            vmem_limit_bytes=64 * 1024 * 1024,
        ),
    )(xp, wp, bp, gp, betap)

    if norm == "batch":
        # Two-phase batch-norm: drop padded batch rows so they cannot contaminate the
        # statistics, then normalize per feature tile over the full (true) batch.
        y = y[:n]
        tn = math.gcd(out_pad, 512)
        kernel2 = functools.partial(batchnorm_relu_kernel, eps=eps, true_n=n)
        y = pl.pallas_call(
            kernel2,
            out_shape=jax.ShapeDtypeStruct((n, out_pad), x.dtype),
            grid_spec=pltpu.PrefetchScalarGridSpec(
                num_scalar_prefetch=0,
                grid=(out_pad // tn,),
                in_specs=[
                    pl.BlockSpec((n, tn), lambda j: (0, j)),
                    pl.BlockSpec((1, tn), lambda j: (0, j)),
                    pl.BlockSpec((1, tn), lambda j: (0, j)),
                ],
                out_specs=pl.BlockSpec((n, tn), lambda j: (0, j)),
            ),
            compiler_params=pltpu.CompilerParams(
                dimension_semantics=("parallel",),
                vmem_limit_bytes=64 * 1024 * 1024,
            ),
        )(y, gp, betap)
        return y[:, :out_dim]

    return y[:n, :out_dim]


# --------------------------------------------------------------------------------------
# Pure-JAX reference
# --------------------------------------------------------------------------------------
def reference_forward(x, w, b, gamma, beta, *, norm="layer", eps=1e-5):
    y = x.astype(jnp.float32) @ w.astype(jnp.float32) + b
    if norm == "layer":
        mean = jnp.mean(y, axis=-1, keepdims=True)
        var = jnp.mean((y - mean) ** 2, axis=-1, keepdims=True)
        y = (y - mean) / jnp.sqrt(var + eps) * gamma + beta
    elif norm == "batch":
        mean = jnp.mean(y, axis=0, keepdims=True)
        var = jnp.mean((y - mean) ** 2, axis=0, keepdims=True)
        y = (y - mean) / jnp.sqrt(var + eps) * gamma + beta
    return jnp.maximum(y, 0.0).astype(x.dtype)


if __name__ == "__main__":
    key = jax.random.PRNGKey(0)
    ok = True
    # Two small shape sets: one aligned, one that exercises the padding paths.
    for (batch, in_dim, out_dim) in [(8, 32, 32), (6, 20, 12)]:
        key, kx, kw, kb, kg, kbt = jax.random.split(key, 6)
        bound = 1.0 / (in_dim ** 0.5)
        x = jax.random.normal(kx, (batch, in_dim), dtype=jnp.float32)
        w = jax.random.uniform(kw, (in_dim, out_dim), jnp.float32, -bound, bound)
        b = jax.random.uniform(kb, (1, out_dim), jnp.float32, -bound, bound)
        gamma = 1.0 + 0.1 * jax.random.normal(kg, (1, out_dim), dtype=jnp.float32)
        beta = 0.1 * jax.random.normal(kbt, (1, out_dim), dtype=jnp.float32)

        for norm in ("layer", "batch", "none"):
            out = jax.block_until_ready(unit_forward(x, w, b, gamma, beta, norm=norm))
            ref = reference_forward(x, w, b, gamma, beta, norm=norm)
            if not jnp.allclose(out, ref, atol=1e-4, rtol=1e-4):
                ok = False
                err = float(jnp.max(jnp.abs(out - ref)))
                print(f"mismatch: shape=({batch},{in_dim},{out_dim}) norm={norm} max_err={err}")

    if ok:
        print("KERNEL_OK")
</pallas_src>

<mosaic_0001>
module attributes {stable_mosaic.version = 11 : i64} {
  func.func @linear_unit_kernel(%arg0: i32, %arg1: i32, %arg2: memref<8x128xf32, #tpu.memory_space<vmem>>, %arg3: memref<128x128xf32, #tpu.memory_space<vmem>>, %arg4: memref<1x128xf32, #tpu.memory_space<vmem>>, %arg5: memref<1x128xf32, #tpu.memory_space<vmem>>, %arg6: memref<1x128xf32, #tpu.memory_space<vmem>>, %arg7: memref<8x128xf32, #tpu.memory_space<vmem>>, %arg8: memref<8x128xf32, #tpu.memory_space<vmem>>) attributes {dimension_semantics = [#tpu.dimension_semantics<parallel>, #tpu.dimension_semantics<arbitrary>], iteration_bounds = array<i64: 1, 1>, scalar_prefetch = 0 : i64, scratch_operands = 1 : i64, tpu.core_type = #tpu.core_type<tc>, window_params = [{transform_indices = @transform_0, window_bounds = array<i64: 8, 128>}, {transform_indices = @transform_1, window_bounds = array<i64: 128, 128>}, {pipeline_mode = #tpu.pipeline_mode<synchronous>, transform_indices = @transform_2, window_bounds = array<i64: 1, 128>}, {pipeline_mode = #tpu.pipeline_mode<synchronous>, transform_indices = @transform_3, window_bounds = array<i64: 1, 128>}, {pipeline_mode = #tpu.pipeline_mode<synchronous>, transform_indices = @transform_4, window_bounds = array<i64: 1, 128>}, {transform_indices = @transform_5, window_bounds = array<i64: 8, 128>}]} {
    %c0_i32 = arith.constant 0 : i32
    %0 = arith.cmpi eq, %arg1, %c0_i32 : i32
    %1 = arith.extui %0 : i1 to i32
    %c0_i32_0 = arith.constant 0 : i32
    %2 = arith.cmpi ne, %1, %c0_i32_0 : i32
    scf.if %2 {
      %c0_10 = arith.constant 0 : index
      %c0_11 = arith.constant 0 : index
      %12 = vector.load %arg4[%c0_10, %c0_11] : memref<1x128xf32, #tpu.memory_space<vmem>>, vector<1x128xf32>
      %13 = vector.shape_cast %12 : vector<1x128xf32> to vector<1x128xf32>
      %14 = vector.broadcast %13 : vector<1x128xf32> to vector<8x128xf32>
      %c0_12 = arith.constant 0 : index
      %c0_13 = arith.constant 0 : index
      %15 = vector.load %arg8[%c0_12, %c0_13] : memref<8x128xf32, #tpu.memory_space<vmem>>, vector<8x128xf32>
      tpu.vector_store %arg8[%c0_12, %c0_13], %14 {strides = array<i32>} : memref<8x128xf32, #tpu.memory_space<vmem>>, vector<8x128xf32>,
    } else {
    }
    %c0 = arith.constant 0 : index
    %c0_1 = arith.constant 0 : index
    %3 = vector.load %arg8[%c0, %c0_1] : memref<8x128xf32, #tpu.memory_space<vmem>>, vector<8x128xf32>
    %c0_2 = arith.constant 0 : index
    %c0_3 = arith.constant 0 : index
    %4 = vector.load %arg2[%c0_2, %c0_3] : memref<8x128xf32, #tpu.memory_space<vmem>>, vector<8x128xf32>
    %c0_4 = arith.constant 0 : index
    %c0_5 = arith.constant 0 : index
    %5 = vector.load %arg3[%c0_4, %c0_5] : memref<128x128xf32, #tpu.memory_space<vmem>>, vector<128x128xf32>
    %cst = arith.constant dense<0.000000e+00> : vector<8x128xf32>
    %6 = tpu.matmul %4, %5, %cst {dimension_numbers = #tpu.dot_dimension_numbers<[1], [0], [0], [1], [0, 0, 1, 1], [], []>} : vector<8x128xf32>, vector<128x128xf32>, vector<8x128xf32> -> vector<8x128xf32>
    %7 = arith.addf %3, %6 : vector<8x128xf32>
    %c0_6 = arith.constant 0 : index
    %c0_7 = arith.constant 0 : index
    %8 = vector.load %arg8[%c0_6, %c0_7] : memref<8x128xf32, #tpu.memory_space<vmem>>, vector<8x128xf32>
    tpu.vector_store %arg8[%c0_6, %c0_7], %7 {strides = array<i32>} : memref<8x128xf32, #tpu.memory_space<vmem>>, vector<8x128xf32>,
    %c0_i32_8 = arith.constant 0 : i32
    %9 = arith.cmpi eq, %arg1, %c0_i32_8 : i32
    %10 = arith.extui %9 : i1 to i32
    %c0_i32_9 = arith.constant 0 : i32
    %11 = arith.cmpi ne, %10, %c0_i32_9 : i32
    scf.if %11 {
      %c0_10 = arith.constant 0 : index
      %c0_11 = arith.constant 0 : index
      %12 = vector.load %arg8[%c0_10, %c0_11] : memref<8x128xf32, #tpu.memory_space<vmem>>, vector<8x128xf32>
      %cst_12 = arith.constant dense<0.000000e+00> : vector<8xf32>
      %13 = vector.multi_reduction <add>, %12, %cst_12 [1] : vector<8x128xf32> to vector<8xf32>
      %14 = vector.shape_cast %13 : vector<8xf32> to vector<8x1xf32>
      %15 = arith.mulf %12, %12 : vector<8x128xf32>
      %cst_13 = arith.constant dense<0.000000e+00> : vector<8xf32>
      %16 = vector.multi_reduction <add>, %15, %cst_13 [1] : vector<8x128xf32> to vector<8xf32>
      %17 = vector.shape_cast %16 : vector<8xf32> to vector<8x1xf32>
      %cst_14 = arith.constant 3.125000e-02 : f32
      %18 = vector.broadcast %cst_14 : f32 to vector<8x1xf32>
      %19 = arith.mulf %14, %18 : vector<8x1xf32>
      %cst_15 = arith.constant 3.125000e-02 : f32
      %20 = vector.broadcast %cst_15 : f32 to vector<8x1xf32>
      %21 = arith.mulf %17, %20 : vector<8x1xf32>
      %22 = arith.mulf %19, %19 : vector<8x1xf32>
      %23 = arith.subf %21, %22 : vector<8x1xf32>
      %cst_16 = arith.constant 0.000000e+00 : f32
      %24 = vector.broadcast %cst_16 : f32 to vector<8x1xf32>
      %25 = arith.maximumf %23, %24 : vector<8x1xf32>
      %26 = vector.broadcast %19 : vector<8x1xf32> to vector<8x128xf32>
      %27 = arith.subf %12, %26 : vector<8x128xf32>
      %cst_17 = arith.constant 9.99999974E-6 : f32
      %28 = vector.broadcast %cst_17 : f32 to vector<8x1xf32>
      %29 = arith.addf %25, %28 : vector<8x1xf32>
      %30 = math.rsqrt %29 : vector<8x1xf32>
      %31 = vector.broadcast %30 : vector<8x1xf32> to vector<8x128xf32>
      %32 = arith.mulf %27, %31 : vector<8x128xf32>
      %c0_18 = arith.constant 0 : index
      %c0_19 = arith.constant 0 : index
      %33 = vector.load %arg5[%c0_18, %c0_19] : memref<1x128xf32, #tpu.memory_space<vmem>>, vector<1x128xf32>
      %34 = vector.broadcast %33 : vector<1x128xf32> to vector<8x128xf32>
      %35 = arith.mulf %32, %34 : vector<8x128xf32>
      %c0_20 = arith.constant 0 : index
      %c0_21 = arith.constant 0 : index
      %36 = vector.load %arg6[%c0_20, %c0_21] : memref<1x128xf32, #tpu.memory_space<vmem>>, vector<1x128xf32>
      %37 = vector.broadcast %36 : vector<1x128xf32> to vector<8x128xf32>
      %38 = arith.addf %35, %37 : vector<8x128xf32>
      %cst_22 = arith.constant 0.000000e+00 : f32
      %39 = vector.broadcast %cst_22 : f32 to vector<8x128xf32>
      %40 = arith.maximumf %38, %39 : vector<8x128xf32>
      %c0_23 = arith.constant 0 : index
      %c0_24 = arith.constant 0 : index
      %41 = vector.load %arg7[%c0_23, %c0_24] : memref<8x128xf32, #tpu.memory_space<vmem>>, vector<8x128xf32>
      tpu.vector_store %arg7[%c0_23, %c0_24], %40 {strides = array<i32>} : memref<8x128xf32, #tpu.memory_space<vmem>>, vector<8x128xf32>,
    } else {
    }
    return
  }
  func.func @transform_0(%arg0: i32, %arg1: i32) -> (i32, i32) {
    %c0_i32 = arith.constant 0 : i32
    return %arg0, %arg1 : i32, i32
  }
  func.func @transform_1(%arg0: i32, %arg1: i32) -> (i32, i32) {
    %c0_i32 = arith.constant 0 : i32
    %c0_i32_0 = arith.constant 0 : i32
    return %arg1, %c0_i32 : i32, i32
  }
  func.func @transform_2(%arg0: i32, %arg1: i32) -> (i32, i32) {
    %c0_i32 = arith.constant 0 : i32
    %c0_i32_0 = arith.constant 0 : i32
    %c0_i32_1 = arith.constant 0 : i32
    return %c0_i32, %c0_i32_0 : i32, i32
  }
  func.func @transform_3(%arg0: i32, %arg1: i32) -> (i32, i32) {
    %c0_i32 = arith.constant 0 : i32
    %c0_i32_0 = arith.constant 0 : i32
    %c0_i32_1 = arith.constant 0 : i32
    return %c0_i32, %c0_i32_0 : i32, i32
  }
  func.func @transform_4(%arg0: i32, %arg1: i32) -> (i32, i32) {
    %c0_i32 = arith.constant 0 : i32
    %c0_i32_0 = arith.constant 0 : i32
    %c0_i32_1 = arith.constant 0 : i32
    return %c0_i32, %c0_i32_0 : i32, i32
  }
  func.func @transform_5(%arg0: i32, %arg1: i32) -> (i32, i32) {
    %c0_i32 = arith.constant 0 : i32
    %c0_i32_0 = arith.constant 0 : i32
    return %arg0, %c0_i32 : i32, i32
  }
}

</mosaic_0001>

<llo_original>
// kernel: tpu_custom_call.1
$region0: #{tpu_custom_call.1}
  #allocation0 [shape = 'u32[]', space=smem, size = 0x4, offset = 0x4, fixed_abs, tag = 'smem constant byte address 0x4 - core index']
  #allocation1 [shape = 'u32[144,128]{1,0:T(1,128)}', space=vmem, size = 0x12000, scoped, tag = 'internal scratch']
  #allocation2 [shape = 'f32[8,128]{1,0:T(8,128)}', space=vmem, size = 0x1000, scoped, tag = 'scratch operand']
  %s0 = inlined_call_operand.hbm [shape: f32[8,128], index: 0, kind: input, shape index: {}]
  %s1 = inlined_call_operand.hbm [shape: f32[128,128], index: 1, kind: input, shape index: {}]
  %s2 = inlined_call_operand.hbm [shape: f32[1,128], index: 2, kind: input, shape index: {}]
  %s3 = inlined_call_operand.hbm [shape: f32[1,128], index: 3, kind: input, shape index: {}]
  %s4 = inlined_call_operand.hbm [shape: f32[1,128], index: 4, kind: input, shape index: {}]
  %s5 = inlined_call_operand.hbm [shape: f32[8,128], index: 5, kind: output, shape index: {}]
  %s6 = sld [smem:[#allocation0]]
  $region58: #{tpu_custom_call.1} parent=0
    _
  %s8 = ssub.s32 1, %s6
  %s9 = scalar_select 0, %s8, %s6
  $region1: #{tpu_custom_call.1} parent=0
    #allocation3 [shape = 'u8[4096]{0}', space=vmem, size = 0x1000, scoped, tag = 'input window, operand 0, single buffered']
    #allocation4 [shape = 's32[1]{0}', space=sflag, size = 0x4, scoped, tag = 'scoped memory for tpu_custom_call.1']
    #allocation5 [shape = 's32[1]{0}', space=sflag, size = 0x4, scoped, tag = 'scoped memory for tpu_custom_call.1']
    #allocation6 [shape = 'u8[65536]{0}', space=vmem, size = 0x10000, scoped, tag = 'input window, operand 1, single buffered']
    #allocation7 [shape = 's32[1]{0}', space=sflag, size = 0x4, scoped, tag = 'scoped memory for tpu_custom_call.1']
    #allocation8 [shape = 'u8[512]{0}', space=vmem, size = 0x400, scoped, tag = 'input window, operand 2, single buffered']
    #allocation9 [shape = 'u8[512]{0}', space=vmem, size = 0x400, scoped, tag = 'input window, operand 3, single buffered']
    #allocation10 [shape = 's32[1]{0}', space=sflag, size = 0x4, scoped, tag = 'scoped memory for tpu_custom_call.1']
    #allocation11 [shape = 'u8[512]{0}', space=vmem, size = 0x400, scoped, tag = 'input window, operand 4, single buffered']
    #allocation12 [shape = 'u8[4096]{0}', space=vmem, size = 0x1000, scoped, tag = 'output window, operand 0, single buffered']
    %10 = vsyncpa [#allocation4], 0
    %11 = vsyncpa [#allocation7], 0
    %12 = vsyncpa [#allocation10], 0
    %13 = vsyncpa [#allocation5], 0
    // Predicated region
    $region2: #{tpu_custom_call.1} parent=1 // pred_check
      _
    $region3: #{tpu_custom_call.1} parent=1 // pred_check_branch
      %15 = sbr.rel (0) target = $region5
    $region4: #{tpu_custom_call.1} parent=1 // pred_region
      %s17 = ssub.s32 128, 128
      %18 = vsyncadd [#allocation4], %s17
      %s20 = sshll.u32 [#allocation3], 4
      %s21 = int_to_ptr.vmem [resolvable:$true] %s20
      %23 = dma.hbm_to_vmem [thread:$0]  %s0, 128, %s21, [#allocation4]
    $region5: #{tpu_custom_call.1} parent=1 // pred_fallthru
      _
    // Predicated region
    $region6: #{tpu_custom_call.1} parent=1 // pred_check
      _
    $region7: #{tpu_custom_call.1} parent=1 // pred_check_branch
      %25 = sbr.rel (0) target = $region9
    $region8: #{tpu_custom_call.1} parent=1 // pred_region
      %s27 = ssub.s32 2048, 2048
      %28 = vsyncadd [#allocation7], %s27
      %s29 = sshll.u32 [#allocation6], 4
      %s30 = int_to_ptr.vmem [resolvable:$true] %s29
      %35 = dma.hbm_to_vmem [thread:$0]  %s1, 2048, %s30, [#allocation7], 128, 128, 8
    $region9: #{tpu_custom_call.1} parent=1 // pred_fallthru
      _
    // Predicated region
    $region10: #{tpu_custom_call.1} parent=1 // pred_check
      _
    $region11: #{tpu_custom_call.1} parent=1 // pred_check_branch
      %37 = sbr.rel (0) target = $region13
    $region12: #{tpu_custom_call.1} parent=1 // pred_region
      %s39 = ssub.s32 16, 16
      %40 = vsyncadd [#allocation7], %s39
      %s42 = sshll.u32 [#allocation8], 4
      %s43 = int_to_ptr.vmem [resolvable:$true] %s42
      %45 = dma.hbm_to_vmem [thread:$0]  %s2, 16, %s43, [#allocation7]
    $region13: #{tpu_custom_call.1} parent=1 // pred_fallthru
      _
    // Predicated region
    $region14: #{tpu_custom_call.1} parent=1 // pred_check
      _
    $region15: #{tpu_custom_call.1} parent=1 // pred_check_branch
      %47 = sbr.rel (0) target = $region17
    $region16: #{tpu_custom_call.1} parent=1 // pred_region
      %s49 = ssub.s32 16, 16
      %50 = vsyncadd [#allocation10], %s49
      %s52 = sshll.u32 [#allocation9], 4
      %s53 = int_to_ptr.vmem [resolvable:$true] %s52
      %55 = dma.hbm_to_vmem [thread:$0]  %s3, 16, %s53, [#allocation10]
    $region17: #{tpu_custom_call.1} parent=1 // pred_fallthru
      _
    // Predicated region
    $region18: #{tpu_custom_call.1} parent=1 // pred_check
      _
    $region19: #{tpu_custom_call.1} parent=1 // pred_check_branch
      %57 = sbr.rel (0) target = $region21
    $region20: #{tpu_custom_call.1} parent=1 // pred_region
      %s59 = ssub.s32 16, 16
      %60 = vsyncadd [#allocation10], %s59
      %s62 = sshll.u32 [#allocation11], 4
      %s63 = int_to_ptr.vmem [resolvable:$true] %s62
      %65 = dma.hbm_to_vmem [thread:$0]  %s4, 16, %s63, [#allocation10]
    $region21: #{tpu_custom_call.1} parent=1 // pred_fallthru
      _
    // Predicated region
    $region22: #{tpu_custom_call.1} parent=1 // pred_check
      _
    $region23: #{tpu_custom_call.1} parent=1 // pred_check_branch
      %67 = sbr.rel (0) target = $region25
    $region24: #{tpu_custom_call.1} parent=1 // pred_region
      %68 = dma.done [#allocation4], 128
    $region25: #{tpu_custom_call.1} parent=1 // pred_fallthru
      _
    // Predicated region
    $region26: #{tpu_custom_call.1} parent=1 // pred_check
      _
    $region27: #{tpu_custom_call.1} parent=1 // pred_check_branch
      %70 = sbr.rel (0) target = $region29
    $region28: #{tpu_custom_call.1} parent=1 // pred_region
      %71 = dma.done [#allocation7], 2048
    $region29: #{tpu_custom_call.1} parent=1 // pred_fallthru
      _
    // Predicated region
    $region30: #{tpu_custom_call.1} parent=1 // pred_check
      _
    $region31: #{tpu_custom_call.1} parent=1 // pred_check_branch
      %73 = sbr.rel (0) target = $region33
    $region32: #{tpu_custom_call.1} parent=1 // pred_region
      %74 = dma.done [#allocation7], 16
    $region33: #{tpu_custom_call.1} parent=1 // pred_fallthru
      _
    // Predicated region
    $region34: #{tpu_custom_call.1} parent=1 // pred_check
      _
    $region35: #{tpu_custom_call.1} parent=1 // pred_check_branch
      %76 = sbr.rel (0) target = $region37
    $region36: #{tpu_custom_call.1} parent=1 // pred_region
      %77 = dma.done [#allocation10], 16
    $region37: #{tpu_custom_call.1} parent=1 // pred_fallthru
      _
    // Predicated region
    $region38: #{tpu_custom_call.1} parent=1 // pred_check
      _
    $region39: #{tpu_custom_call.1} parent=1 // pred_check_branch
      %79 = sbr.rel (0) target = $region41
    $region40: #{tpu_custom_call.1} parent=1 // pred_region
      %80 = dma.done [#allocation10], 16
    $region41: #{tpu_custom_call.1} parent=1 // pred_fallthru
      _
    %p81 = scmp.eq.s32.totalorder 0, 0
    // Predicated region
    $region42: #{tpu_custom_call.1} parent=1 // pred_check
      %p82 = pneg %p81
    $region43: #{tpu_custom_call.1} parent=1 // pred_check_branch
      %84 = sbr.rel (%p82) target = $region45
    $region44: #{tpu_custom_call.1} parent=1 // pred_region
      %v85 = vld [vmem:[#allocation8] sm:$0x1]
      %v87 = vlaneseq
      %v88 = vshrl.u32 %v87, 7
      %v89 = vsub.s32 0, %v88
      %v90 = vrot.slane %v85, %v89
      %92 = vst [vmem:[#allocation2] sm:$0xff] %v90
    $region45: #{tpu_custom_call.1} parent=1 // pred_fallthru
      _
    %v93 = vld [vmem:[#allocation2] sm:$0xff]
    %v94 = vld [vmem:[#allocation3] sm:$0xff]
    %v95 = vld [vmem:[#allocation6] sm:$0xff]
    %v96 = vld [vmem:[#allocation6 + $0x8] sm:$0xff]
    %v97 = vld [vmem:[#allocation6 + $0x10] sm:$0xff]
    %v98 = vld [vmem:[#allocation6 + $0x18] sm:$0xff]
    %v99 = vld [vmem:[#allocation6 + $0x20] sm:$0xff]
    %v100 = vld [vmem:[#allocation6 + $0x28] sm:$0xff]
    %v101 = vld [vmem:[#allocation6 + $0x30] sm:$0xff]
    %v102 = vld [vmem:[#allocation6 + $0x38] sm:$0xff]
    %v103 = vld [vmem:[#allocation6 + $0x40] sm:$0xff]
    %v104 = vld [vmem:[#allocation6 + $0x48] sm:$0xff]
    %v105 = vld [vmem:[#allocation6 + $0x50] sm:$0xff]
    %v106 = vld [vmem:[#allocation6 + $0x58] sm:$0xff]
    %v107 = vld [vmem:[#allocation6 + $0x60] sm:$0xff]
    %v108 = vld [vmem:[#allocation6 + $0x68] sm:$0xff]
    %v109 = vld [vmem:[#allocation6 + $0x70] sm:$0xff]
    %v110 = vld [vmem:[#allocation6 + $0x78] sm:$0xff]
    %111 = vmatprep.subr.mxu0 0.0
    %112 = vmatpush1.msra.mxu0 %v95
    %113 = vmatprep.subr.mxu0 0.0
    %114 = vmatpush1.msra.mxu0 %v96
    %115 = vmatprep.subr.mxu0 0.0
    %116 = vmatpush1.msra.mxu0 %v97
    %117 = vmatprep.subr.mxu0 0.0
    %118 = vmatpush1.msra.mxu0 %v98
    %119 = vmatprep.subr.mxu0 0.0
    %120 = vmatpush1.msra.mxu0 %v99
    %121 = vmatprep.subr.mxu0 0.0
    %122 = vmatpush1.msra.mxu0 %v100
    %123 = vmatprep.subr.mxu0 0.0
    %124 = vmatpush1.msra.mxu0 %v101
    %125 = vmatprep.subr.mxu0 0.0
    %126 = vmatpush1.msra.mxu0 %v102
    %127 = vmatprep.subr.mxu0 0.0
    %128 = vmatpush1.msra.mxu0 %v103
    %129 = vmatprep.subr.mxu0 0.0
    %130 = vmatpush1.msra.mxu0 %v104
    %131 = vmatprep.subr.mxu0 0.0
    %132 = vmatpush1.msra.mxu0 %v105
    %133 = vmatprep.subr.mxu0 0.0
    %134 = vmatpush1.msra.mxu0 %v106
    %135 = vmatprep.subr.mxu0 0.0
    %136 = vmatpush1.msra.mxu0 %v107
    %137 = vmatprep.subr.mxu0 0.0
    %138 = vmatpush1.msra.mxu0 %v108
    %139 = vmatprep.subr.mxu0 0.0
    %140 = vmatpush1.msra.mxu0 %v109
    %141 = vmatprep.subr.mxu0 0.0
    %142 = vmatpush1.msra.mxu0 %v110
    %143 = vmatprep.subr.mxu0 0.0
    %144 = vmatpush1.msra.mxu0 0.0
    %145 = vmatprep.subr.mxu0 0.0
    %146 = vmatpush1.msra.mxu0 0.0
    %147 = vmatprep.subr.mxu0 0.0
    %148 = vmatpush1.msra.mxu0 0.0
    %149 = vmatprep.subr.mxu0 0.0
    %150 = vmatpush1.msra.mxu0 0.0
    %151 = vmatprep.subr.mxu0 0.0
    %152 = vmatpush1.msra.mxu0 0.0
    %153 = vmatprep.subr.mxu0 0.0
    %154 = vmatpush1.msra.mxu0 0.0
    %155 = vmatprep.subr.mxu0 0.0
    %156 = vmatpush1.msra.mxu0 0.0
    %157 = vmatprep.subr.mxu0 0.0
    %158 = vmatpush1.msra.mxu0 0.0
    %159 = vmatprep.subr.mxu0 0.0
    %160 = vmatpush1.msra.mxu0 0.0
    %161 = vmatprep.subr.mxu0 0.0
    %162 = vmatpush1.msra.mxu0 0.0
    %163 = vmatprep.subr.mxu0 0.0
    %164 = vmatpush1.msra.mxu0 0.0
    %165 = vmatprep.subr.mxu0 0.0
    %166 = vmatpush1.msra.mxu0 0.0
    %167 = vmatprep.subr.mxu0 0.0
    %168 = vmatpush1.msra.mxu0 0.0
    %169 = vmatprep.subr.mxu0 0.0
    %170 = vmatpush1.msra.mxu0 0.0
    %171 = vmatprep.subr.mxu0 0.0
    %172 = vmatpush1.msra.mxu0 0.0
    %173 = vmatprep.subr.mxu0 0.0
    %174 = vmatpush1.msra.mxu0 0.0
    %175 = vmatprep.mubr.f32.mxu0 0.0
    %176 = vmatmul.mubr.f32.gmra.mrb[0].mxu0 %v94
    %v177 = vpop.f32.mrb[0].mxu0
    %v178 = vadd.f32 0.0, %v177
    %v179 = vpop.f32.mrb[0].mxu0
    %180 = vdwg.mxu0
    %v181 = vadd.f32 %v93, %v178
    %182 = vst [vmem:[#allocation2] sm:$0xff] %v181
    // Predicated region
    $region46: #{tpu_custom_call.1} parent=1 // pred_check
      %p183 = pneg %p81
    $region47: #{tpu_custom_call.1} parent=1 // pred_check_branch
      %185 = sbr.rel (%p183) target = $region49
    $region48: #{tpu_custom_call.1} parent=1 // pred_region
      %v186 = vld [vmem:[#allocation2] sm:$0xff]
      %187 = vadd.xlane.f32.xlu0 %v186
      %v188 = vpop.xlane.xlu0 %187
      %v189 = vmul.f32 %v186, %v186
      %190 = vadd.xlane.f32.xlu0 %v189
      %v191 = vpop.xlane.xlu0 %190
      %v192 = vmul.f32 %v188, 0.03125
      %v193 = vmul.f32 %v191, 0.03125
      %v194 = vmul.f32 %v192, %v192
      %v195 = vsub.f32 %v193, %v194
      %v196 = vmax.f32 %v195, 0.0
      %v197 = vsub.f32 %v186, %v192
      %v198 = vadd.f32 %v196, 1e-05
      %v199 = vrsqrt.pop %v198
      %v200 = vmul.f32 %v197, %v199
      %v201 = vld [vmem:[#allocation9] sm:$0x1]
      %v203 = vlaneseq
      %v204 = vshrl.u32 %v203, 7
      %v205 = vsub.s32 0, %v204
      %v206 = vrot.slane %v201, %v205
      %v208 = vmul.f32 %v200, %v206
      %v209 = vld [vmem:[#allocation11] sm:$0x1]
      %v211 = vlaneseq
      %v212 = vshrl.u32 %v211, 7
      %v213 = vsub.s32 0, %v212
      %v214 = vrot.slane %v209, %v213
      %v216 = vadd.f32 %v208, %v214
      %v217 = vmax.f32 %v216, 0.0
      %218 = vst [vmem:[#allocation12] sm:$0xff] %v217
    $region49: #{tpu_custom_call.1} parent=1 // pred_fallthru
      _
    // Predicated region
    $region50: #{tpu_custom_call.1} parent=1 // pred_check
      _
    $region51: #{tpu_custom_call.1} parent=1 // pred_check_branch
      %220 = sbr.rel (0) target = $region53
    $region52: #{tpu_custom_call.1} parent=1 // pred_region
      %s222 = ssub.s32 128, 128
      %223 = vsyncadd [#allocation5], %s222
      %s225 = sshll.u32 [#allocation12], 4
      %s226 = int_to_ptr.vmem [resolvable:$true] %s225
      %228 = dma.vmem_to_hbm [thread:$0]  %s226, 128, %s5, [#allocation5]
    $region53: #{tpu_custom_call.1} parent=1 // pred_fallthru
      _
    // Predicated region
    $region54: #{tpu_custom_call.1} parent=1 // pred_check
      _
    $region55: #{tpu_custom_call.1} parent=1 // pred_check_branch
      %230 = sbr.rel (0) target = $region57
    $region56: #{tpu_custom_call.1} parent=1 // pred_region
      %231 = dma.done [#allocation5], 128
    $region57: #{tpu_custom_call.1} parent=1 // pred_fallthru
      _
    %232 = vsyncpa [#allocation4], 1
    %233 = vsyncpa [#allocation7], 1
    %234 = vsyncpa [#allocation10], 1
    %235 = vsyncpa [#allocation5], 1

</llo_original>
